<compile_context>
chip_gen: v7x
topology: tpu7x:2x2x1
jax: 0.10.0
libtpu: 0.0.40
codegen_flags: <defaults>
</compile_context>

<pallas_src>
import jax
import jax.numpy as jnp
from jax.experimental import pallas as pl
from jax.experimental.pallas import tpu as pltpu

# Small synthetic config (aligned to TPU lane width 128).
CONFIG = dict(hidden_size=256, intermediate_size=512, mlp_bias=False)


def _round_up(x, m):
    return (x + m - 1) // m * m


def _pick_ti(intermediate, cap=2048):
    """Largest multiple of 128 that divides `intermediate` and is <= cap."""
    ti = min((intermediate // 128) * 128, cap)
    while ti >= 128:
        if intermediate % ti == 0:
            return ti
        ti -= 128
    return intermediate  # fallback: whole intermediate dim in one tile


def _mlp_kernel(x_ref, wgu_ref, wd_ref, o_ref, acc_ref):
    # x_ref:   (tm, H)     bf16 token tile (resident across the I axis)
    # wgu_ref: (H, 2*ti)   bf16 fused [gate_j | up_j] weight tile
    # wd_ref:  (ti, H)     bf16 down_proj weight tile
    # o_ref:   (tm, H)     output tile (written on the last I step)
    # acc_ref: (tm, H) f32 accumulator scratch (persists across the I axis)
    j = pl.program_id(1)

    @pl.when(j == 0)
    def _():
        acc_ref[...] = jnp.zeros_like(acc_ref)

    ti = wgu_ref.shape[1] // 2
    # Fused gate+up projection: a single MXU pass over x, f32 accumulation.
    gu = jnp.dot(x_ref[...], wgu_ref[...], preferred_element_type=jnp.float32)
    g = gu[:, :ti]              # lane-aligned split (ti is a multiple of 128)
    u = gu[:, ti:]
    h = (g * jax.nn.sigmoid(g)) * u                      # SiLU * up in f32 (VPU/EUP)
    acc_ref[...] += jnp.dot(h.astype(wd_ref.dtype), wd_ref[...],
                            preferred_element_type=jnp.float32)

    @pl.when(j == pl.num_programs(1) - 1)
    def _():
        o_ref[...] = acc_ref[...].astype(o_ref.dtype)


def llama_mlp(x, wg, wu, wd, *, tm=256, ti=None):
    """SwiGLU MLP: down_proj(silu(x @ wg) * (x @ wu)).

    x:  (..., H)
    wg: (H, I) gate_proj weight (stored [in, out])
    wu: (H, I) up_proj weight
    wd: (I, H) down_proj weight
    """
    H, I = wg.shape
    assert wu.shape == (H, I) and wd.shape == (I, H)
    assert tm % 8 == 0

    orig_shape = x.shape
    out_dtype = x.dtype
    x2 = x.reshape(-1, H)
    M = x2.shape[0]

    # Token tile: big enough to keep the MXU busy, but don't over-pad tiny inputs.
    # Token dim is zero-padded to a multiple of the tile and sliced back afterwards.
    tm_eff = min(tm, _round_up(M, 8))
    M_pad = _round_up(M, tm_eff)
    if M_pad != M:
        x2 = jnp.pad(x2, ((0, M_pad - M), (0, 0)))

    # Intermediate-dim tile: stream (H, 2*ti) gate/up and (ti, H) down tiles so the
    # weights never need to be fully resident in VMEM at real Llama sizes.
    if ti is None:
        ti = _pick_ti(I)
    assert I % ti == 0 and ti % 128 == 0
    n_i = I // ti

    # bf16 MXU operands (accumulation stays f32 inside the kernel).
    xb = x2.astype(jnp.bfloat16)
    # Interleave gate/up tiles so column block j of the fused weight is [gate_j | up_j].
    wgu = jnp.concatenate(
        [wg.astype(jnp.bfloat16).reshape(H, n_i, ti),
         wu.astype(jnp.bfloat16).reshape(H, n_i, ti)],
        axis=-1).reshape(H, 2 * I)
    wdb = wd.astype(jnp.bfloat16)

    grid = (M_pad // tm_eff, n_i)
    out_itemsize = jnp.dtype(out_dtype).itemsize

    # VMEM budget: double-buffered tiles + f32 accumulator + f32 intermediates.
    vmem_est = (
        2 * tm_eff * H * 2              # x tile (bf16, double-buffered)
        + 2 * H * (2 * ti) * 2          # fused gate/up weight tile
        + 2 * ti * H * 2                # down weight tile
        + 2 * tm_eff * H * out_itemsize # output tile
        + tm_eff * H * 4                # accumulator scratch
        + 3 * tm_eff * ti * 4           # gu / h f32 temporaries
    )
    vmem_limit = int(min(max(2 * vmem_est, 32 * 1024 * 1024), 64 * 1024 * 1024))

    cost = pl.CostEstimate(
        flops=6 * M_pad * H * I,          # fused gate+up (4*M*H*I) + down (2*M*I*H)
        transcendentals=M_pad * I,        # sigmoid
        bytes_accessed=int(xb.size * 2
                           + grid[0] * (wgu.size + wdb.size) * 2
                           + M_pad * H * out_itemsize),
    )

    out = pl.pallas_call(
        _mlp_kernel,
        out_shape=jax.ShapeDtypeStruct((M_pad, H), out_dtype),
        grid_spec=pltpu.PrefetchScalarGridSpec(
            num_scalar_prefetch=0,
            grid=grid,
            in_specs=[
                pl.BlockSpec((tm_eff, H), lambda i, j: (i, 0)),   # x (resident over j)
                pl.BlockSpec((H, 2 * ti), lambda i, j: (0, j)),   # fused gate/up tile
                pl.BlockSpec((ti, H), lambda i, j: (j, 0)),       # down tile
            ],
            out_specs=pl.BlockSpec((tm_eff, H), lambda i, j: (i, 0)),
            scratch_shapes=[pltpu.VMEM((tm_eff, H), jnp.float32)],
        ),
        compiler_params=pltpu.CompilerParams(
            dimension_semantics=("parallel", "arbitrary"),
            vmem_limit_bytes=vmem_limit,
        ),
        cost_estimate=cost,
    )(xb, wgu, wdb)

    return out[:M].reshape(orig_shape)


if __name__ == "__main__":
    H = CONFIG["hidden_size"]
    I = CONFIG["intermediate_size"]
    batch, seq = 2, 8

    key = jax.random.PRNGKey(0)
    kx, kg, ku, kd = jax.random.split(key, 4)
    x = jax.random.normal(kx, (batch, seq, H), dtype=jnp.float32)
    # deterministic "Kaiming-ish" init, stored [in, out]
    wg = jax.random.normal(kg, (H, I), dtype=jnp.float32) * (1.0 / H) ** 0.5
    wu = jax.random.normal(ku, (H, I), dtype=jnp.float32) * (1.0 / H) ** 0.5
    wd = jax.random.normal(kd, (I, H), dtype=jnp.float32) * (1.0 / I) ** 0.5

    out = llama_mlp(x, wg, wu, wd)
    out = jax.block_until_ready(out)
    assert out.shape == (batch, seq, H)

    # Reference 1: bf16-operand matched reference (same precision as the kernel).
    x2 = x.reshape(-1, H).astype(jnp.bfloat16)
    gb = jnp.dot(x2, wg.astype(jnp.bfloat16), preferred_element_type=jnp.float32)
    ub = jnp.dot(x2, wu.astype(jnp.bfloat16), preferred_element_type=jnp.float32)
    hb = (gb * jax.nn.sigmoid(gb)) * ub
    ref_bf16 = jnp.dot(hb.astype(jnp.bfloat16), wd.astype(jnp.bfloat16),
                       preferred_element_type=jnp.float32).reshape(batch, seq, H)
    assert jnp.allclose(out.astype(jnp.float32), ref_bf16, atol=2e-3, rtol=2e-3), \
        "mismatch vs bf16-matched reference"

    # Reference 2: pure f32 reference (PyTorch semantics); loose check since the
    # kernel uses bf16 MXU operands.
    g = x @ wg
    u = x @ wu
    ref_f32 = ((g * jax.nn.sigmoid(g)) * u) @ wd
    rel_err = jnp.linalg.norm(out - ref_f32) / jnp.linalg.norm(ref_f32)
    assert rel_err < 5e-2, f"relative error vs f32 reference too large: {rel_err}"

    print("KERNEL_OK")
</pallas_src>

<mosaic_0001>
module attributes {stable_mosaic.version = 11 : i64} {
  func.func @_mlp_kernel(%arg0: i32, %arg1: i32, %arg2: memref<16x256xbf16, #tpu.memory_space<vmem>>, %arg3: memref<256x1024xbf16, #tpu.memory_space<vmem>>, %arg4: memref<512x256xbf16, #tpu.memory_space<vmem>>, %arg5: memref<16x256xf32, #tpu.memory_space<vmem>>, %arg6: memref<16x256xf32, #tpu.memory_space<vmem>>) attributes {dimension_semantics = [#tpu.dimension_semantics<parallel>, #tpu.dimension_semantics<arbitrary>], iteration_bounds = array<i64: 1, 1>, scalar_prefetch = 0 : i64, scratch_operands = 1 : i64, tpu.core_type = #tpu.core_type<tc>, window_params = [{transform_indices = @transform_0, window_bounds = array<i64: 16, 256>}, {transform_indices = @transform_1, window_bounds = array<i64: 256, 1024>}, {transform_indices = @transform_2, window_bounds = array<i64: 512, 256>}, {transform_indices = @transform_3, window_bounds = array<i64: 16, 256>}]} {
    %c0_i32 = arith.constant 0 : i32
    %0 = arith.cmpi eq, %arg1, %c0_i32 : i32
    %1 = arith.extui %0 : i1 to i32
    %c0_i32_0 = arith.constant 0 : i32
    %2 = arith.cmpi ne, %1, %c0_i32_0 : i32
    scf.if %2 {
      %cst_14 = arith.constant 0.000000e+00 : f32
      %24 = vector.broadcast %cst_14 : f32 to vector<16x256xf32>
      %c0_15 = arith.constant 0 : index
      %c0_16 = arith.constant 0 : index
      %25 = vector.load %arg6[%c0_15, %c0_16] : memref<16x256xf32, #tpu.memory_space<vmem>>, vector<16x256xf32>
      tpu.vector_store %arg6[%c0_15, %c0_16], %24 {strides = array<i32>} : memref<16x256xf32, #tpu.memory_space<vmem>>, vector<16x256xf32>,
    } else {
    }
    %c0 = arith.constant 0 : index
    %c0_1 = arith.constant 0 : index
    %3 = vector.load %arg2[%c0, %c0_1] : memref<16x256xbf16, #tpu.memory_space<vmem>>, vector<16x256xbf16>
    %c0_2 = arith.constant 0 : index
    %c0_3 = arith.constant 0 : index
    %4 = vector.load %arg3[%c0_2, %c0_3] : memref<256x1024xbf16, #tpu.memory_space<vmem>>, vector<256x1024xbf16>
    %cst = arith.constant dense<0.000000e+00> : vector<16x1024xf32>
    %5 = tpu.matmul %3, %4, %cst {dimension_numbers = #tpu.dot_dimension_numbers<[1], [0], [0], [1], [0, 0, 1, 1], [], []>} : vector<16x256xbf16>, vector<256x1024xbf16>, vector<16x1024xf32> -> vector<16x1024xf32>
    %6 = vector.extract_strided_slice %5 {offsets = [0, 0], sizes = [16, 512], strides = [1, 1]} : vector<16x1024xf32> to vector<16x512xf32>
    %7 = vector.extract_strided_slice %5 {offsets = [0, 512], sizes = [16, 512], strides = [1, 1]} : vector<16x1024xf32> to vector<16x512xf32>
    %8 = arith.negf %6 : vector<16x512xf32>
    %9 = math.exp %8 : vector<16x512xf32>
    %cst_4 = arith.constant 1.000000e+00 : f32
    %10 = vector.broadcast %cst_4 : f32 to vector<16x512xf32>
    %11 = arith.addf %10, %9 : vector<16x512xf32>
    %12 = arith.divf %10, %11 : vector<16x512xf32>
    %13 = arith.mulf %6, %12 : vector<16x512xf32>
    %14 = arith.mulf %13, %7 : vector<16x512xf32>
    %c0_5 = arith.constant 0 : index
    %c0_6 = arith.constant 0 : index
    %15 = vector.load %arg6[%c0_5, %c0_6] : memref<16x256xf32, #tpu.memory_space<vmem>>, vector<16x256xf32>
    %16 = arith.truncf %14 : vector<16x512xf32> to vector<16x512xbf16>
    %c0_7 = arith.constant 0 : index
    %c0_8 = arith.constant 0 : index
    %17 = vector.load %arg4[%c0_7, %c0_8] : memref<512x256xbf16, #tpu.memory_space<vmem>>, vector<512x256xbf16>
    %cst_9 = arith.constant dense<0.000000e+00> : vector<16x256xf32>
    %18 = tpu.matmul %16, %17, %cst_9 {dimension_numbers = #tpu.dot_dimension_numbers<[1], [0], [0], [1], [0, 0, 1, 1], [], []>} : vector<16x512xbf16>, vector<512x256xbf16>, vector<16x256xf32> -> vector<16x256xf32>
    %19 = arith.addf %15, %18 : vector<16x256xf32>
    %c0_10 = arith.constant 0 : index
    %c0_11 = arith.constant 0 : index
    %20 = vector.load %arg6[%c0_10, %c0_11] : memref<16x256xf32, #tpu.memory_space<vmem>>, vector<16x256xf32>
    tpu.vector_store %arg6[%c0_10, %c0_11], %19 {strides = array<i32>} : memref<16x256xf32, #tpu.memory_space<vmem>>, vector<16x256xf32>,
    %c0_i32_12 = arith.constant 0 : i32
    %21 = arith.cmpi eq, %arg1, %c0_i32_12 : i32
    %22 = arith.extui %21 : i1 to i32
    %c0_i32_13 = arith.constant 0 : i32
    %23 = arith.cmpi ne, %22, %c0_i32_13 : i32
    scf.if %23 {
      %c0_14 = arith.constant 0 : index
      %c0_15 = arith.constant 0 : index
      %24 = vector.load %arg6[%c0_14, %c0_15] : memref<16x256xf32, #tpu.memory_space<vmem>>, vector<16x256xf32>
      %c0_16 = arith.constant 0 : index
      %c0_17 = arith.constant 0 : index
      %25 = vector.load %arg5[%c0_16, %c0_17] : memref<16x256xf32, #tpu.memory_space<vmem>>, vector<16x256xf32>
      tpu.vector_store %arg5[%c0_16, %c0_17], %24 {strides = array<i32>} : memref<16x256xf32, #tpu.memory_space<vmem>>, vector<16x256xf32>,
    } else {
    }
    return
  }
  func.func @transform_0(%arg0: i32, %arg1: i32) -> (i32, i32) {
    %c0_i32 = arith.constant 0 : i32
    %c0_i32_0 = arith.constant 0 : i32
    return %arg0, %c0_i32 : i32, i32
  }
  func.func @transform_1(%arg0: i32, %arg1: i32) -> (i32, i32) {
    %c0_i32 = arith.constant 0 : i32
    %c0_i32_0 = arith.constant 0 : i32
    return %c0_i32, %arg1 : i32, i32
  }
  func.func @transform_2(%arg0: i32, %arg1: i32) -> (i32, i32) {
    %c0_i32 = arith.constant 0 : i32
    %c0_i32_0 = arith.constant 0 : i32
    return %arg1, %c0_i32 : i32, i32
  }
  func.func @transform_3(%arg0: i32, %arg1: i32) -> (i32, i32) {
    %c0_i32 = arith.constant 0 : i32
    %c0_i32_0 = arith.constant 0 : i32
    return %arg0, %c0_i32 : i32, i32
  }
}

</mosaic_0001>

<llo_original>
// kernel: tpu_custom_call.1
$region0: #{tpu_custom_call.1}
  #allocation0 [shape = 'u32[]', space=smem, size = 0x4, offset = 0x4, fixed_abs, tag = 'smem constant byte address 0x4 - core index']
  #allocation1 [shape = 'u32[144,128]{1,0:T(1,128)}', space=vmem, size = 0x12000, scoped, tag = 'internal scratch']
  #allocation2 [shape = 'f32[16,256]{1,0:T(8,128)}', space=vmem, size = 0x4000, scoped, tag = 'scratch operand']
  %s0 = inlined_call_operand.hbm [shape: bf16[16,256], index: 0, kind: input, shape index: {}]
  %s1 = inlined_call_operand.hbm [shape: bf16[256,1024], index: 1, kind: input, shape index: {}]
  %s2 = inlined_call_operand.hbm [shape: bf16[512,256], index: 2, kind: input, shape index: {}]
  %s3 = inlined_call_operand.hbm [shape: f32[16,256], index: 3, kind: output, shape index: {}]
  %s4 = sld [smem:[#allocation0]]
  $region42: #{tpu_custom_call.1} parent=0
    _
  %s6 = ssub.s32 1, %s4
  %s7 = scalar_select 0, %s6, %s4
  $region1: #{tpu_custom_call.1} parent=0
    #allocation3 [shape = 'u8[8192]{0}', space=vmem, size = 0x2000, scoped, tag = 'input window, operand 0, single buffered']
    #allocation4 [shape = 's32[1]{0}', space=sflag, size = 0x4, scoped, tag = 'scoped memory for tpu_custom_call.1']
    #allocation5 [shape = 's32[1]{0}', space=sflag, size = 0x4, scoped, tag = 'scoped memory for tpu_custom_call.1']
    #allocation6 [shape = 'u8[524288]{0}', space=vmem, size = 0x80000, scoped, tag = 'input window, operand 1, single buffered']
    #allocation7 [shape = 's32[1]{0}', space=sflag, size = 0x4, scoped, tag = 'scoped memory for tpu_custom_call.1']
    #allocation8 [shape = 'u8[262144]{0}', space=vmem, size = 0x40000, scoped, tag = 'input window, operand 2, single buffered']
    #allocation9 [shape = 'u8[16384]{0}', space=vmem, size = 0x4000, scoped, tag = 'output window, operand 0, single buffered']
    %8 = vsyncpa [#allocation4], 0
    %9 = vsyncpa [#allocation7], 0
    %10 = vsyncpa [#allocation5], 0
    // Predicated region
    $region2: #{tpu_custom_call.1} parent=1 // pred_check
      _
    $region3: #{tpu_custom_call.1} parent=1 // pred_check_branch
      %12 = sbr.rel (0) target = $region5
    $region4: #{tpu_custom_call.1} parent=1 // pred_region
      %s14 = ssub.s32 256, 256
      %15 = vsyncadd [#allocation4], %s14
      %s16 = sshll.u32 [#allocation3], 4
      %s17 = int_to_ptr.vmem [resolvable:$true] %s16
      %22 = dma.hbm_to_vmem [thread:$0]  %s0, 256, %s17, [#allocation4], 128, 128, 8
    $region5: #{tpu_custom_call.1} parent=1 // pred_fallthru
      _
    // Predicated region
    $region6: #{tpu_custom_call.1} parent=1 // pred_check
      _
    $region7: #{tpu_custom_call.1} parent=1 // pred_check_branch
      %24 = sbr.rel (0) target = $region9
    $region8: #{tpu_custom_call.1} parent=1 // pred_region
      %s26 = ssub.s32 16384, 16384
      %27 = vsyncadd [#allocation7], %s26
      %s28 = sshll.u32 [#allocation6], 4
      %s29 = int_to_ptr.vmem [resolvable:$true] %s28
      %34 = dma.hbm_to_vmem [thread:$0]  %s1, 16384, %s29, [#allocation7], 512, 512, 32
    $region9: #{tpu_custom_call.1} parent=1 // pred_fallthru
      _
    // Predicated region
    $region10: #{tpu_custom_call.1} parent=1 // pred_check
      _
    $region11: #{tpu_custom_call.1} parent=1 // pred_check_branch
      %36 = sbr.rel (0) target = $region13
    $region12: #{tpu_custom_call.1} parent=1 // pred_region
      %s38 = ssub.s32 8192, 8192
      %39 = vsyncadd [#allocation7], %s38
      %s40 = sshll.u32 [#allocation8], 4
      %s41 = int_to_ptr.vmem [resolvable:$true] %s40
      %46 = dma.hbm_to_vmem [thread:$0]  %s2, 8192, %s41, [#allocation7], 128, 128, 8
    $region13: #{tpu_custom_call.1} parent=1 // pred_fallthru
      _
    // Predicated region
    $region14: #{tpu_custom_call.1} parent=1 // pred_check
      _
    $region15: #{tpu_custom_call.1} parent=1 // pred_check_branch
      %48 = sbr.rel (0) target = $region17
    $region16: #{tpu_custom_call.1} parent=1 // pred_region
      %49 = dma.done [#allocation4], 256
    $region17: #{tpu_custom_call.1} parent=1 // pred_fallthru
      _
    // Predicated region
    $region18: #{tpu_custom_call.1} parent=1 // pred_check
      _
    $region19: #{tpu_custom_call.1} parent=1 // pred_check_branch
      %51 = sbr.rel (0) target = $region21
    $region20: #{tpu_custom_call.1} parent=1 // pred_region
      %52 = dma.done [#allocation7], 16384
    $region21: #{tpu_custom_call.1} parent=1 // pred_fallthru
      _
    // Predicated region
    $region22: #{tpu_custom_call.1} parent=1 // pred_check
      _
    $region23: #{tpu_custom_call.1} parent=1 // pred_check_branch
      %54 = sbr.rel (0) target = $region25
    $region24: #{tpu_custom_call.1} parent=1 // pred_region
      %55 = dma.done [#allocation7], 8192
    $region25: #{tpu_custom_call.1} parent=1 // pred_fallthru
      _
    %p56 = scmp.eq.s32.totalorder 0, 0
    // Predicated region
    $region26: #{tpu_custom_call.1} parent=1 // pred_check
      %p57 = pneg %p56
    $region27: #{tpu_custom_call.1} parent=1 // pred_check_branch
      %59 = sbr.rel (%p57) target = $region29
    $region28: #{tpu_custom_call.1} parent=1 // pred_region
      %60 = vst [vmem:[#allocation2] sm:$0xff] 0.0
      %61 = vst [vmem:[#allocation2 + $0x8] sm:$0xff] 0.0
      %62 = vst [vmem:[#allocation2 + $0x10] sm:$0xff] 0.0
      %63 = vst [vmem:[#allocation2 + $0x18] sm:$0xff] 0.0
    $region29: #{tpu_custom_call.1} parent=1 // pred_fallthru
      _
    %v64 = vld [vmem:[#allocation3] sm:$0xff]
    %v65 = vld [vmem:[#allocation3 + $0x8] sm:$0xff]
    %v66 = vld [vmem:[#allocation6] sm:$0xff]
    %v67 = vld [vmem:[#allocation6 + $0x8] sm:$0xff]
    %v68 = vld [vmem:[#allocation6 + $0x10] sm:$0xff]
    %v69 = vld [vmem:[#allocation6 + $0x18] sm:$0xff]
    %v70 = vld [vmem:[#allocation6 + $0x20] sm:$0xff]
    %v71 = vld [vmem:[#allocation6 + $0x28] sm:$0xff]
    %v72 = vld [vmem:[#allocation6 + $0x30] sm:$0xff]
    %v73 = vld [vmem:[#allocation6 + $0x38] sm:$0xff]
    %v74 = vld [vmem:[#allocation6 + $0x40] sm:$0xff]
    %v75 = vld [vmem:[#allocation6 + $0x48] sm:$0xff]
    %v76 = vld [vmem:[#allocation6 + $0x50] sm:$0xff]
    %v77 = vld [vmem:[#allocation6 + $0x58] sm:$0xff]
    %v78 = vld [vmem:[#allocation6 + $0x60] sm:$0xff]
    %v79 = vld [vmem:[#allocation6 + $0x68] sm:$0xff]
    %v80 = vld [vmem:[#allocation6 + $0x70] sm:$0xff]
    %v81 = vld [vmem:[#allocation6 + $0x78] sm:$0xff]
    %v82 = vld [vmem:[#allocation6 + $0x80] sm:$0xff]
    %v83 = vld [vmem:[#allocation6 + $0x88] sm:$0xff]
    %v84 = vld [vmem:[#allocation6 + $0x90] sm:$0xff]
    %v85 = vld [vmem:[#allocation6 + $0x98] sm:$0xff]
    %v86 = vld [vmem:[#allocation6 + $0xa0] sm:$0xff]
    %v87 = vld [vmem:[#allocation6 + $0xa8] sm:$0xff]
    %v88 = vld [vmem:[#allocation6 + $0xb0] sm:$0xff]
    %v89 = vld [vmem:[#allocation6 + $0xb8] sm:$0xff]
    %v90 = vld [vmem:[#allocation6 + $0xc0] sm:$0xff]
    %v91 = vld [vmem:[#allocation6 + $0xc8] sm:$0xff]
    %v92 = vld [vmem:[#allocation6 + $0xd0] sm:$0xff]
    %v93 = vld [vmem:[#allocation6 + $0xd8] sm:$0xff]
    %v94 = vld [vmem:[#allocation6 + $0xe0] sm:$0xff]
    %v95 = vld [vmem:[#allocation6 + $0xe8] sm:$0xff]
    %v96 = vld [vmem:[#allocation6 + $0xf0] sm:$0xff]
    %v97 = vld [vmem:[#allocation6 + $0xf8] sm:$0xff]
    %v98 = vld [vmem:[#allocation6 + $0x100] sm:$0xff]
    %v99 = vld [vmem:[#allocation6 + $0x108] sm:$0xff]
    %v100 = vld [vmem:[#allocation6 + $0x110] sm:$0xff]
    %v101 = vld [vmem:[#allocation6 + $0x118] sm:$0xff]
    %v102 = vld [vmem:[#allocation6 + $0x120] sm:$0xff]
    %v103 = vld [vmem:[#allocation6 + $0x128] sm:$0xff]
    %v104 = vld [vmem:[#allocation6 + $0x130] sm:$0xff]
    %v105 = vld [vmem:[#allocation6 + $0x138] sm:$0xff]
    %v106 = vld [vmem:[#allocation6 + $0x140] sm:$0xff]
    %v107 = vld [vmem:[#allocation6 + $0x148] sm:$0xff]
    %v108 = vld [vmem:[#allocation6 + $0x150] sm:$0xff]
    %v109 = vld [vmem:[#allocation6 + $0x158] sm:$0xff]
    %v110 = vld [vmem:[#allocation6 + $0x160] sm:$0xff]
    %v111 = vld [vmem:[#allocation6 + $0x168] sm:$0xff]
    %v112 = vld [vmem:[#allocation6 + $0x170] sm:$0xff]
    %v113 = vld [vmem:[#allocation6 + $0x178] sm:$0xff]
    %v114 = vld [vmem:[#allocation6 + $0x180] sm:$0xff]
    %v115 = vld [vmem:[#allocation6 + $0x188] sm:$0xff]
    %v116 = vld [vmem:[#allocation6 + $0x190] sm:$0xff]
    %v117 = vld [vmem:[#allocation6 + $0x198] sm:$0xff]
    %v118 = vld [vmem:[#allocation6 + $0x1a0] sm:$0xff]
    %v119 = vld [vmem:[#allocation6 + $0x1a8] sm:$0xff]
    %v120 = vld [vmem:[#allocation6 + $0x1b0] sm:$0xff]
    %v121 = vld [vmem:[#allocation6 + $0x1b8] sm:$0xff]
    %v122 = vld [vmem:[#allocation6 + $0x1c0] sm:$0xff]
    %v123 = vld [vmem:[#allocation6 + $0x1c8] sm:$0xff]
    %v124 = vld [vmem:[#allocation6 + $0x1d0] sm:$0xff]
    %v125 = vld [vmem:[#allocation6 + $0x1d8] sm:$0xff]
    %v126 = vld [vmem:[#allocation6 + $0x1e0] sm:$0xff]
    %v127 = vld [vmem:[#allocation6 + $0x1e8] sm:$0xff]
    %v128 = vld [vmem:[#allocation6 + $0x1f0] sm:$0xff]
    %v129 = vld [vmem:[#allocation6 + $0x1f8] sm:$0xff]
    %v130 = vld [vmem:[#allocation6 + $0x200] sm:$0xff]
    %v131 = vld [vmem:[#allocation6 + $0x208] sm:$0xff]
    %v132 = vld [vmem:[#allocation6 + $0x210] sm:$0xff]
    %v133 = vld [vmem:[#allocation6 + $0x218] sm:$0xff]
    %v134 = vld [vmem:[#allocation6 + $0x220] sm:$0xff]
    %v135 = vld [vmem:[#allocation6 + $0x228] sm:$0xff]
    %v136 = vld [vmem:[#allocation6 + $0x230] sm:$0xff]
    %v137 = vld [vmem:[#allocation6 + $0x238] sm:$0xff]
    %v138 = vld [vmem:[#allocation6 + $0x240] sm:$0xff]
    %v139 = vld [vmem:[#allocation6 + $0x248] sm:$0xff]
    %v140 = vld [vmem:[#allocation6 + $0x250] sm:$0xff]
    %v141 = vld [vmem:[#allocation6 + $0x258] sm:$0xff]
    %v142 = vld [vmem:[#allocation6 + $0x260] sm:$0xff]
    %v143 = vld [vmem:[#allocation6 + $0x268] sm:$0xff]
    %v144 = vld [vmem:[#allocation6 + $0x270] sm:$0xff]
    %v145 = vld [vmem:[#allocation6 + $0x278] sm:$0xff]
    %v146 = vld [vmem:[#allocation6 + $0x280] sm:$0xff]
    %v147 = vld [vmem:[#allocation6 + $0x288] sm:$0xff]
    %v148 = vld [vmem:[#allocation6 + $0x290] sm:$0xff]
    %v149 = vld [vmem:[#allocation6 + $0x298] sm:$0xff]
    %v150 = vld [vmem:[#allocation6 + $0x2a0] sm:$0xff]
    %v151 = vld [vmem:[#allocation6 + $0x2a8] sm:$0xff]
    %v152 = vld [vmem:[#allocation6 + $0x2b0] sm:$0xff]
    %v153 = vld [vmem:[#allocation6 + $0x2b8] sm:$0xff]
    %v154 = vld [vmem:[#allocation6 + $0x2c0] sm:$0xff]
    %v155 = vld [vmem:[#allocation6 + $0x2c8] sm:$0xff]
    %v156 = vld [vmem:[#allocation6 + $0x2d0] sm:$0xff]
    %v157 = vld [vmem:[#allocation6 + $0x2d8] sm:$0xff]
    %v158 = vld [vmem:[#allocation6 + $0x2e0] sm:$0xff]
    %v159 = vld [vmem:[#allocation6 + $0x2e8] sm:$0xff]
    %v160 = vld [vmem:[#allocation6 + $0x2f0] sm:$0xff]
    %v161 = vld [vmem:[#allocation6 + $0x2f8] sm:$0xff]
    %v162 = vld [vmem:[#allocation6 + $0x300] sm:$0xff]
    %v163 = vld [vmem:[#allocation6 + $0x308] sm:$0xff]
    %v164 = vld [vmem:[#allocation6 + $0x310] sm:$0xff]
    %v165 = vld [vmem:[#allocation6 + $0x318] sm:$0xff]
    %v166 = vld [vmem:[#allocation6 + $0x320] sm:$0xff]
    %v167 = vld [vmem:[#allocation6 + $0x328] sm:$0xff]
    %v168 = vld [vmem:[#allocation6 + $0x330] sm:$0xff]
    %v169 = vld [vmem:[#allocation6 + $0x338] sm:$0xff]
    %v170 = vld [vmem:[#allocation6 + $0x340] sm:$0xff]
    %v171 = vld [vmem:[#allocation6 + $0x348] sm:$0xff]
    %v172 = vld [vmem:[#allocation6 + $0x350] sm:$0xff]
    %v173 = vld [vmem:[#allocation6 + $0x358] sm:$0xff]
    %v174 = vld [vmem:[#allocation6 + $0x360] sm:$0xff]
    %v175 = vld [vmem:[#allocation6 + $0x368] sm:$0xff]
    %v176 = vld [vmem:[#allocation6 + $0x370] sm:$0xff]
    %v177 = vld [vmem:[#allocation6 + $0x378] sm:$0xff]
    %v178 = vld [vmem:[#allocation6 + $0x380] sm:$0xff]
    %v179 = vld [vmem:[#allocation6 + $0x388] sm:$0xff]
    %v180 = vld [vmem:[#allocation6 + $0x390] sm:$0xff]
    %v181 = vld [vmem:[#allocation6 + $0x398] sm:$0xff]
    %v182 = vld [vmem:[#allocation6 + $0x3a0] sm:$0xff]
    %v183 = vld [vmem:[#allocation6 + $0x3a8] sm:$0xff]
    %v184 = vld [vmem:[#allocation6 + $0x3b0] sm:$0xff]
    %v185 = vld [vmem:[#allocation6 + $0x3b8] sm:$0xff]
    %v186 = vld [vmem:[#allocation6 + $0x3c0] sm:$0xff]
    %v187 = vld [vmem:[#allocation6 + $0x3c8] sm:$0xff]
    %v188 = vld [vmem:[#allocation6 + $0x3d0] sm:$0xff]
    %v189 = vld [vmem:[#allocation6 + $0x3d8] sm:$0xff]
    %v190 = vld [vmem:[#allocation6 + $0x3e0] sm:$0xff]
    %v191 = vld [vmem:[#allocation6 + $0x3e8] sm:$0xff]
    %v192 = vld [vmem:[#allocation6 + $0x3f0] sm:$0xff]
    %v193 = vld [vmem:[#allocation6 + $0x3f8] sm:$0xff]
    %v196 = vunpack.c.l.b16 %v64
    %v197 = vunpack.c.h.b16 %v64
    %v198 = vunpack.c.l.b16 %v65
    %v199 = vunpack.c.h.b16 %v65
    %v200 = vpack.c.b16 %v198, %v196
    %v201 = vpack.c.b16 %v199, %v197
    %v332 = vunpack.c.l.b16 %v66
    %v333 = vunpack.c.h.b16 %v66
    %v334 = vunpack.c.l.b16 %v67
    %v335 = vunpack.c.h.b16 %v67
    %v336 = vunpack.c.l.b16 %v68
    %v337 = vunpack.c.h.b16 %v68
    %v338 = vunpack.c.l.b16 %v69
    %v339 = vunpack.c.h.b16 %v69
    %v340 = vunpack.c.l.b16 %v70
    %v341 = vunpack.c.h.b16 %v70
    %v342 = vunpack.c.l.b16 %v71
    %v343 = vunpack.c.h.b16 %v71
    %v344 = vunpack.c.l.b16 %v72
    %v345 = vunpack.c.h.b16 %v72
    %v346 = vunpack.c.l.b16 %v73
    %v347 = vunpack.c.h.b16 %v73
    %v348 = vunpack.c.l.b16 %v74
    %v349 = vunpack.c.h.b16 %v74
    %v350 = vunpack.c.l.b16 %v75
    %v351 = vunpack.c.h.b16 %v75
    %v352 = vunpack.c.l.b16 %v76
    %v353 = vunpack.c.h.b16 %v76
    %v354 = vunpack.c.l.b16 %v77
    %v355 = vunpack.c.h.b16 %v77
    %v356 = vunpack.c.l.b16 %v78
    %v357 = vunpack.c.h.b16 %v78
    %v358 = vunpack.c.l.b16 %v79
    %v359 = vunpack.c.h.b16 %v79
    %v360 = vunpack.c.l.b16 %v80
    %v361 = vunpack.c.h.b16 %v80
    %v362 = vunpack.c.l.b16 %v81
    %v363 = vunpack.c.h.b16 %v81
    %v364 = vunpack.c.l.b16 %v82
    %v365 = vunpack.c.h.b16 %v82
    %v366 = vunpack.c.l.b16 %v83
    %v367 = vunpack.c.h.b16 %v83
    %v368 = vunpack.c.l.b16 %v84
    %v369 = vunpack.c.h.b16 %v84
    %v370 = vunpack.c.l.b16 %v85
    %v371 = vunpack.c.h.b16 %v85
    %v372 = vunpack.c.l.b16 %v86
    %v373 = vunpack.c.h.b16 %v86
    %v374 = vunpack.c.l.b16 %v87
    %v375 = vunpack.c.h.b16 %v87
    %v376 = vunpack.c.l.b16 %v88
    %v377 = vunpack.c.h.b16 %v88
    %v378 = vunpack.c.l.b16 %v89
    %v379 = vunpack.c.h.b16 %v89
    %v380 = vunpack.c.l.b16 %v90
    %v381 = vunpack.c.h.b16 %v90
    %v382 = vunpack.c.l.b16 %v91
    %v383 = vunpack.c.h.b16 %v91
    %v384 = vunpack.c.l.b16 %v92
    %v385 = vunpack.c.h.b16 %v92
    %v386 = vunpack.c.l.b16 %v93
    %v387 = vunpack.c.h.b16 %v93
    %v388 = vunpack.c.l.b16 %v94
    %v389 = vunpack.c.h.b16 %v94
    %v390 = vunpack.c.l.b16 %v95
    %v391 = vunpack.c.h.b16 %v95
    %v392 = vunpack.c.l.b16 %v96
    %v393 = vunpack.c.h.b16 %v96
    %v394 = vunpack.c.l.b16 %v97
    %v395 = vunpack.c.h.b16 %v97
    %v396 = vunpack.c.l.b16 %v98
    %v397 = vunpack.c.h.b16 %v98
    %v398 = vunpack.c.l.b16 %v99
    %v399 = vunpack.c.h.b16 %v99
    %v400 = vunpack.c.l.b16 %v100
    %v401 = vunpack.c.h.b16 %v100
    %v402 = vunpack.c.l.b16 %v101
    %v403 = vunpack.c.h.b16 %v101
    %v404 = vunpack.c.l.b16 %v102
    %v405 = vunpack.c.h.b16 %v102
    %v406 = vunpack.c.l.b16 %v103
    %v407 = vunpack.c.h.b16 %v103
    %v408 = vunpack.c.l.b16 %v104
    %v409 = vunpack.c.h.b16 %v104
    %v410 = vunpack.c.l.b16 %v105
    %v411 = vunpack.c.h.b16 %v105
    %v412 = vunpack.c.l.b16 %v106
    %v413 = vunpack.c.h.b16 %v106
    %v414 = vunpack.c.l.b16 %v107
    %v415 = vunpack.c.h.b16 %v107
    %v416 = vunpack.c.l.b16 %v108
    %v417 = vunpack.c.h.b16 %v108
    %v418 = vunpack.c.l.b16 %v109
    %v419 = vunpack.c.h.b16 %v109
    %v420 = vunpack.c.l.b16 %v110
    %v421 = vunpack.c.h.b16 %v110
    %v422 = vunpack.c.l.b16 %v111
    %v423 = vunpack.c.h.b16 %v111
    %v424 = vunpack.c.l.b16 %v112
    %v425 = vunpack.c.h.b16 %v112
    %v426 = vunpack.c.l.b16 %v113
    %v427 = vunpack.c.h.b16 %v113
    %v428 = vunpack.c.l.b16 %v114
    %v429 = vunpack.c.h.b16 %v114
    %v430 = vunpack.c.l.b16 %v115
    %v431 = vunpack.c.h.b16 %v115
    %v432 = vunpack.c.l.b16 %v116
    %v433 = vunpack.c.h.b16 %v116
    %v434 = vunpack.c.l.b16 %v117
    %v435 = vunpack.c.h.b16 %v117
    %v436 = vunpack.c.l.b16 %v118
    %v437 = vunpack.c.h.b16 %v118
    %v438 = vunpack.c.l.b16 %v119
    %v439 = vunpack.c.h.b16 %v119
    %v440 = vunpack.c.l.b16 %v120
    %v441 = vunpack.c.h.b16 %v120
    %v442 = vunpack.c.l.b16 %v121
    %v443 = vunpack.c.h.b16 %v121
    %v444 = vunpack.c.l.b16 %v122
    %v445 = vunpack.c.h.b16 %v122
    %v446 = vunpack.c.l.b16 %v123
    %v447 = vunpack.c.h.b16 %v123
    %v448 = vunpack.c.l.b16 %v124
    %v449 = vunpack.c.h.b16 %v124
    %v450 = vunpack.c.l.b16 %v125
    %v451 = vunpack.c.h.b16 %v125
    %v452 = vunpack.c.l.b16 %v126
    %v453 = vunpack.c.h.b16 %v126
    %v454 = vunpack.c.l.b16 %v127
    %v455 = vunpack.c.h.b16 %v127
    %v456 = vunpack.c.l.b16 %v128
    %v457 = vunpack.c.h.b16 %v128
    %v458 = vunpack.c.l.b16 %v129
    %v459 = vunpack.c.h.b16 %v129
    %v460 = vunpack.c.l.b16 %v130
    %v461 = vunpack.c.h.b16 %v130
    %v462 = vunpack.c.l.b16 %v131
    %v463 = vunpack.c.h.b16 %v131
    %v464 = vunpack.c.l.b16 %v132
    %v465 = vunpack.c.h.b16 %v132
    %v466 = vunpack.c.l.b16 %v133
    %v467 = vunpack.c.h.b16 %v133
    %v468 = vunpack.c.l.b16 %v134
    %v469 = vunpack.c.h.b16 %v134
    %v470 = vunpack.c.l.b16 %v135
    %v471 = vunpack.c.h.b16 %v135
    %v472 = vunpack.c.l.b16 %v136
    %v473 = vunpack.c.h.b16 %v136
    %v474 = vunpack.c.l.b16 %v137
    %v475 = vunpack.c.h.b16 %v137
    %v476 = vunpack.c.l.b16 %v138
    %v477 = vunpack.c.h.b16 %v138
    %v478 = vunpack.c.l.b16 %v139
    %v479 = vunpack.c.h.b16 %v139
    %v480 = vunpack.c.l.b16 %v140
    %v481 = vunpack.c.h.b16 %v140
    %v482 = vunpack.c.l.b16 %v141
    %v483 = vunpack.c.h.b16 %v141
    %v484 = vunpack.c.l.b16 %v142
    %v485 = vunpack.c.h.b16 %v142
    %v486 = vunpack.c.l.b16 %v143
    %v487 = vunpack.c.h.b16 %v143
    %v488 = vunpack.c.l.b16 %v144
    %v489 = vunpack.c.h.b16 %v144
    %v490 = vunpack.c.l.b16 %v145
    %v491 = vunpack.c.h.b16 %v145
    %v492 = vunpack.c.l.b16 %v146
    %v493 = vunpack.c.h.b16 %v146
    %v494 = vunpack.c.l.b16 %v147
    %v495 = vunpack.c.h.b16 %v147
    %v496 = vunpack.c.l.b16 %v148
    %v497 = vunpack.c.h.b16 %v148
    %v498 = vunpack.c.l.b16 %v149
    %v499 = vunpack.c.h.b16 %v149
    %v500 = vunpack.c.l.b16 %v150
    %v501 = vunpack.c.h.b16 %v150
    %v502 = vunpack.c.l.b16 %v151
    %v503 = vunpack.c.h.b16 %v151
    %v504 = vunpack.c.l.b16 %v152
    %v505 = vunpack.c.h.b16 %v152
    %v506 = vunpack.c.l.b16 %v153
    %v507 = vunpack.c.h.b16 %v153
    %v508 = vunpack.c.l.b16 %v154
    %v509 = vunpack.c.h.b16 %v154
    %v510 = vunpack.c.l.b16 %v155
    %v511 = vunpack.c.h.b16 %v155
    %v512 = vunpack.c.l.b16 %v156
    %v513 = vunpack.c.h.b16 %v156
    %v514 = vunpack.c.l.b16 %v157
    %v515 = vunpack.c.h.b16 %v157
    %v516 = vunpack.c.l.b16 %v158
    %v517 = vunpack.c.h.b16 %v158
    %v518 = vunpack.c.l.b16 %v159
    %v519 = vunpack.c.h.b16 %v159
    %v520 = vunpack.c.l.b16 %v160
    %v521 = vunpack.c.h.b16 %v160
    %v522 = vunpack.c.l.b16 %v161
    %v523 = vunpack.c.h.b16 %v161
    %v524 = vunpack.c.l.b16 %v162
    %v525 = vunpack.c.h.b16 %v162
    %v526 = vunpack.c.l.b16 %v163
    %v527 = vunpack.c.h.b16 %v163
    %v528 = vunpack.c.l.b16 %v164
    %v529 = vunpack.c.h.b16 %v164
    %v530 = vunpack.c.l.b16 %v165
    %v531 = vunpack.c.h.b16 %v165
    %v532 = vunpack.c.l.b16 %v166
    %v533 = vunpack.c.h.b16 %v166
    %v534 = vunpack.c.l.b16 %v167
    %v535 = vunpack.c.h.b16 %v167
    %v536 = vunpack.c.l.b16 %v168
    %v537 = vunpack.c.h.b16 %v168
    %v538 = vunpack.c.l.b16 %v169
    %v539 = vunpack.c.h.b16 %v169
    %v540 = vunpack.c.l.b16 %v170
    %v541 = vunpack.c.h.b16 %v170
    %v542 = vunpack.c.l.b16 %v171
    %v543 = vunpack.c.h.b16 %v171
    %v544 = vunpack.c.l.b16 %v172
    %v545 = vunpack.c.h.b16 %v172
    %v546 = vunpack.c.l.b16 %v173
    %v547 = vunpack.c.h.b16 %v173
    %v548 = vunpack.c.l.b16 %v174
    %v549 = vunpack.c.h.b16 %v174
    %v550 = vunpack.c.l.b16 %v175
    %v551 = vunpack.c.h.b16 %v175
    %v552 = vunpack.c.l.b16 %v176
    %v553 = vunpack.c.h.b16 %v176
    %v554 = vunpack.c.l.b16 %v177
    %v555 = vunpack.c.h.b16 %v177
    %v556 = vunpack.c.l.b16 %v178
    %v557 = vunpack.c.h.b16 %v178
    %v558 = vunpack.c.l.b16 %v179
    %v559 = vunpack.c.h.b16 %v179
    %v560 = vunpack.c.l.b16 %v180
    %v561 = vunpack.c.h.b16 %v180
    %v562 = vunpack.c.l.b16 %v181
    %v563 = vunpack.c.h.b16 %v181
    %v564 = vunpack.c.l.b16 %v182
    %v565 = vunpack.c.h.b16 %v182
    %v566 = vunpack.c.l.b16 %v183
    %v567 = vunpack.c.h.b16 %v183
    %v568 = vunpack.c.l.b16 %v184
    %v569 = vunpack.c.h.b16 %v184
    %v570 = vunpack.c.l.b16 %v185
    %v571 = vunpack.c.h.b16 %v185
    %v572 = vunpack.c.l.b16 %v186
    %v573 = vunpack.c.h.b16 %v186
    %v574 = vunpack.c.l.b16 %v187
    %v575 = vunpack.c.h.b16 %v187
    %v576 = vunpack.c.l.b16 %v188
    %v577 = vunpack.c.h.b16 %v188
    %v578 = vunpack.c.l.b16 %v189
    %v579 = vunpack.c.h.b16 %v189
    %v580 = vunpack.c.l.b16 %v190
    %v581 = vunpack.c.h.b16 %v190
    %v582 = vunpack.c.l.b16 %v191
    %v583 = vunpack.c.h.b16 %v191
    %v584 = vunpack.c.l.b16 %v192
    %v585 = vunpack.c.h.b16 %v192
    %v586 = vunpack.c.l.b16 %v193
    %v587 = vunpack.c.h.b16 %v193
    %v588 = vpack.c.b16 %v340, %v332
    %v589 = vpack.c.b16 %v341, %v333
    %v590 = vpack.c.b16 %v342, %v334
    %v591 = vpack.c.b16 %v343, %v335
    %v592 = vpack.c.b16 %v344, %v336
    %v593 = vpack.c.b16 %v345, %v337
    %v594 = vpack.c.b16 %v346, %v338
    %v595 = vpack.c.b16 %v347, %v339
    %v596 = vpack.c.b16 %v356, %v348
    %v597 = vpack.c.b16 %v357, %v349
    %v598 = vpack.c.b16 %v358, %v350
    %v599 = vpack.c.b16 %v359, %v351
    %v600 = vpack.c.b16 %v360, %v352
    %v601 = vpack.c.b16 %v361, %v353
    %v602 = vpack.c.b16 %v362, %v354
    %v603 = vpack.c.b16 %v363, %v355
    %v604 = vpack.c.b16 %v372, %v364
    %v605 = vpack.c.b16 %v373, %v365
    %v606 = vpack.c.b16 %v374, %v366
    %v607 = vpack.c.b16 %v375, %v367
    %v608 = vpack.c.b16 %v376, %v368
    %v609 = vpack.c.b16 %v377, %v369
    %v610 = vpack.c.b16 %v378, %v370
    %v611 = vpack.c.b16 %v379, %v371
    %v612 = vpack.c.b16 %v388, %v380
    %v613 = vpack.c.b16 %v389, %v381
    %v614 = vpack.c.b16 %v390, %v382
    %v615 = vpack.c.b16 %v391, %v383
    %v616 = vpack.c.b16 %v392, %v384
    %v617 = vpack.c.b16 %v393, %v385
    %v618 = vpack.c.b16 %v394, %v386
    %v619 = vpack.c.b16 %v395, %v387
    %v620 = vpack.c.b16 %v404, %v396
    %v621 = vpack.c.b16 %v405, %v397
    %v622 = vpack.c.b16 %v406, %v398
    %v623 = vpack.c.b16 %v407, %v399
    %v624 = vpack.c.b16 %v408, %v400
    %v625 = vpack.c.b16 %v409, %v401
    %v626 = vpack.c.b16 %v410, %v402
    %v627 = vpack.c.b16 %v411, %v403
    %v628 = vpack.c.b16 %v420, %v412
    %v629 = vpack.c.b16 %v421, %v413
    %v630 = vpack.c.b16 %v422, %v414
    %v631 = vpack.c.b16 %v423, %v415
    %v632 = vpack.c.b16 %v424, %v416
    %v633 = vpack.c.b16 %v425, %v417
    %v634 = vpack.c.b16 %v426, %v418
    %v635 = vpack.c.b16 %v427, %v419
    %v636 = vpack.c.b16 %v436, %v428
    %v637 = vpack.c.b16 %v437, %v429
    %v638 = vpack.c.b16 %v438, %v430
    %v639 = vpack.c.b16 %v439, %v431
    %v640 = vpack.c.b16 %v440, %v432
    %v641 = vpack.c.b16 %v441, %v433
    %v642 = vpack.c.b16 %v442, %v434
    %v643 = vpack.c.b16 %v443, %v435
    %v644 = vpack.c.b16 %v452, %v444
    %v645 = vpack.c.b16 %v453, %v445
    %v646 = vpack.c.b16 %v454, %v446
    %v647 = vpack.c.b16 %v455, %v447
    %v648 = vpack.c.b16 %v456, %v448
    %v649 = vpack.c.b16 %v457, %v449
    %v650 = vpack.c.b16 %v458, %v450
    %v651 = vpack.c.b16 %v459, %v451
    %v652 = vpack.c.b16 %v468, %v460
    %v653 = vpack.c.b16 %v469, %v461
    %v654 = vpack.c.b16 %v470, %v462
    %v655 = vpack.c.b16 %v471, %v463
    %v656 = vpack.c.b16 %v472, %v464
    %v657 = vpack.c.b16 %v473, %v465
    %v658 = vpack.c.b16 %v474, %v466
    %v659 = vpack.c.b16 %v475, %v467
    %v660 = vpack.c.b16 %v484, %v476
    %v661 = vpack.c.b16 %v485, %v477
    %v662 = vpack.c.b16 %v486, %v478
    %v663 = vpack.c.b16 %v487, %v479
    %v664 = vpack.c.b16 %v488, %v480
    %v665 = vpack.c.b16 %v489, %v481
    %v666 = vpack.c.b16 %v490, %v482
    %v667 = vpack.c.b16 %v491, %v483
    %v668 = vpack.c.b16 %v500, %v492
    %v669 = vpack.c.b16 %v501, %v493
    %v670 = vpack.c.b16 %v502, %v494
    %v671 = vpack.c.b16 %v503, %v495
    %v672 = vpack.c.b16 %v504, %v496
    %v673 = vpack.c.b16 %v505, %v497
    %v674 = vpack.c.b16 %v506, %v498
    %v675 = vpack.c.b16 %v507, %v499
    %v676 = vpack.c.b16 %v516, %v508
    %v677 = vpack.c.b16 %v517, %v509
    %v678 = vpack.c.b16 %v518, %v510
    %v679 = vpack.c.b16 %v519, %v511
    %v680 = vpack.c.b16 %v520, %v512
    %v681 = vpack.c.b16 %v521, %v513
    %v682 = vpack.c.b16 %v522, %v514
    %v683 = vpack.c.b16 %v523, %v515
    %v684 = vpack.c.b16 %v532, %v524
    %v685 = vpack.c.b16 %v533, %v525
    %v686 = vpack.c.b16 %v534, %v526
    %v687 = vpack.c.b16 %v535, %v527
    %v688 = vpack.c.b16 %v536, %v528
    %v689 = vpack.c.b16 %v537, %v529
    %v690 = vpack.c.b16 %v538, %v530
    %v691 = vpack.c.b16 %v539, %v531
    %v692 = vpack.c.b16 %v548, %v540
    %v693 = vpack.c.b16 %v549, %v541
    %v694 = vpack.c.b16 %v550, %v542
    %v695 = vpack.c.b16 %v551, %v543
    %v696 = vpack.c.b16 %v552, %v544
    %v697 = vpack.c.b16 %v553, %v545
    %v698 = vpack.c.b16 %v554, %v546
    %v699 = vpack.c.b16 %v555, %v547
    %v700 = vpack.c.b16 %v564, %v556
    %v701 = vpack.c.b16 %v565, %v557
    %v702 = vpack.c.b16 %v566, %v558
    %v703 = vpack.c.b16 %v567, %v559
    %v704 = vpack.c.b16 %v568, %v560
    %v705 = vpack.c.b16 %v569, %v561
    %v706 = vpack.c.b16 %v570, %v562
    %v707 = vpack.c.b16 %v571, %v563
    %v708 = vpack.c.b16 %v580, %v572
    %v709 = vpack.c.b16 %v581, %v573
    %v710 = vpack.c.b16 %v582, %v574
    %v711 = vpack.c.b16 %v583, %v575
    %v712 = vpack.c.b16 %v584, %v576
    %v713 = vpack.c.b16 %v585, %v577
    %v714 = vpack.c.b16 %v586, %v578
    %v715 = vpack.c.b16 %v587, %v579
    %844 = vmatprep.subr.bf16.mxu0 %v589
    %845 = vmatpush1.bf16.msra.mxu0 %v588
    %846 = vmatprep.subr.bf16.mxu0 %v597
    %847 = vmatpush1.bf16.msra.mxu0 %v596
    %848 = vmatprep.subr.bf16.mxu0 %v605
    %849 = vmatpush1.bf16.msra.mxu0 %v604
    %850 = vmatprep.subr.bf16.mxu0 %v613
    %851 = vmatpush1.bf16.msra.mxu0 %v612
    %852 = vmatprep.subr.bf16.mxu0 %v621
    %853 = vmatpush1.bf16.msra.mxu0 %v620
    %854 = vmatprep.subr.bf16.mxu0 %v629
    %855 = vmatpush1.bf16.msra.mxu0 %v628
    %856 = vmatprep.subr.bf16.mxu0 %v637
    %857 = vmatpush1.bf16.msra.mxu0 %v636
    %858 = vmatprep.subr.bf16.mxu0 %v645
    %859 = vmatpush1.bf16.msra.mxu0 %v644
    %860 = vmatprep.subr.bf16.mxu0 %v653
    %861 = vmatpush1.bf16.msra.mxu0 %v652
    %862 = vmatprep.subr.bf16.mxu0 %v661
    %863 = vmatpush1.bf16.msra.mxu0 %v660
    %864 = vmatprep.subr.bf16.mxu0 %v669
    %865 = vmatpush1.bf16.msra.mxu0 %v668
    %866 = vmatprep.subr.bf16.mxu0 %v677
    %867 = vmatpush1.bf16.msra.mxu0 %v676
    %868 = vmatprep.subr.bf16.mxu0 %v685
    %869 = vmatpush1.bf16.msra.mxu0 %v684
    %870 = vmatprep.subr.bf16.mxu0 %v693
    %871 = vmatpush1.bf16.msra.mxu0 %v692
    %872 = vmatprep.subr.bf16.mxu0 %v701
    %873 = vmatpush1.bf16.msra.mxu0 %v700
    %874 = vmatprep.subr.bf16.mxu0 %v709
    %875 = vmatpush1.bf16.msra.mxu0 %v708
    %876 = vmatprep.mubr.bf16.mxu0 %v201
    %877 = vmatmul.mubr.bf16.gmra.mrb[0].mxu0 %v200
    %v878 = vpop.f32.mrb[0].mxu0
    %v879 = vadd.f32 0.0, %v878
    %v880 = vpop.f32.mrb[0].mxu0
    %v881 = vadd.f32 0.0, %v880
    %v882 = vpop.f32.mrb[0].mxu0
    %v883 = vadd.f32 0.0, %v882
    %v884 = vpop.f32.mrb[0].mxu0
    %v885 = vadd.f32 0.0, %v884
    %886 = vdwg.mxu0
    %887 = vmatprep.subr.bf16.mxu0 %v591
    %888 = vmatpush1.bf16.msra.mxu0 %v590
    %889 = vmatprep.subr.bf16.mxu0 %v599
    %890 = vmatpush1.bf16.msra.mxu0 %v598
    %891 = vmatprep.subr.bf16.mxu0 %v607
    %892 = vmatpush1.bf16.msra.mxu0 %v606
    %893 = vmatprep.subr.bf16.mxu0 %v615
    %894 = vmatpush1.bf16.msra.mxu0 %v614
    %895 = vmatprep.subr.bf16.mxu0 %v623
    %896 = vmatpush1.bf16.msra.mxu0 %v622
    %897 = vmatprep.subr.bf16.mxu0 %v631
    %898 = vmatpush1.bf16.msra.mxu0 %v630
    %899 = vmatprep.subr.bf16.mxu0 %v639
    %900 = vmatpush1.bf16.msra.mxu0 %v638
    %901 = vmatprep.subr.bf16.mxu0 %v647
    %902 = vmatpush1.bf16.msra.mxu0 %v646
    %903 = vmatprep.subr.bf16.mxu0 %v655
    %904 = vmatpush1.bf16.msra.mxu0 %v654
    %905 = vmatprep.subr.bf16.mxu0 %v663
    %906 = vmatpush1.bf16.msra.mxu0 %v662
    %907 = vmatprep.subr.bf16.mxu0 %v671
    %908 = vmatpush1.bf16.msra.mxu0 %v670
    %909 = vmatprep.subr.bf16.mxu0 %v679
    %910 = vmatpush1.bf16.msra.mxu0 %v678
    %911 = vmatprep.subr.bf16.mxu0 %v687
    %912 = vmatpush1.bf16.msra.mxu0 %v686
    %913 = vmatprep.subr.bf16.mxu0 %v695
    %914 = vmatpush1.bf16.msra.mxu0 %v694
    %915 = vmatprep.subr.bf16.mxu0 %v703
    %916 = vmatpush1.bf16.msra.mxu0 %v702
    %917 = vmatprep.subr.bf16.mxu0 %v711
    %918 = vmatpush1.bf16.msra.mxu0 %v710
    %919 = vmatprep.mubr.bf16.mxu0 %v201
    %920 = vmatmul.mubr.bf16.gmra.mrb[0].mxu0 %v200
    %v921 = vpop.f32.mrb[0].mxu0
    %v922 = vadd.f32 0.0, %v921
    %v923 = vpop.f32.mrb[0].mxu0
    %v924 = vadd.f32 0.0, %v923
    %v925 = vpop.f32.mrb[0].mxu0
    %v926 = vadd.f32 0.0, %v925
    %v927 = vpop.f32.mrb[0].mxu0
    %v928 = vadd.f32 0.0, %v927
    %929 = vdwg.mxu0
    %930 = vmatprep.subr.bf16.mxu0 %v593
    %931 = vmatpush1.bf16.msra.mxu0 %v592
    %932 = vmatprep.subr.bf16.mxu0 %v601
    %933 = vmatpush1.bf16.msra.mxu0 %v600
    %934 = vmatprep.subr.bf16.mxu0 %v609
    %935 = vmatpush1.bf16.msra.mxu0 %v608
    %936 = vmatprep.subr.bf16.mxu0 %v617
    %937 = vmatpush1.bf16.msra.mxu0 %v616
    %938 = vmatprep.subr.bf16.mxu0 %v625
    %939 = vmatpush1.bf16.msra.mxu0 %v624
    %940 = vmatprep.subr.bf16.mxu0 %v633
    %941 = vmatpush1.bf16.msra.mxu0 %v632
    %942 = vmatprep.subr.bf16.mxu0 %v641
    %943 = vmatpush1.bf16.msra.mxu0 %v640
    %944 = vmatprep.subr.bf16.mxu0 %v649
    %945 = vmatpush1.bf16.msra.mxu0 %v648
    %946 = vmatprep.subr.bf16.mxu0 %v657
    %947 = vmatpush1.bf16.msra.mxu0 %v656
    %948 = vmatprep.subr.bf16.mxu0 %v665
    %949 = vmatpush1.bf16.msra.mxu0 %v664
    %950 = vmatprep.subr.bf16.mxu0 %v673
    %951 = vmatpush1.bf16.msra.mxu0 %v672
    %952 = vmatprep.subr.bf16.mxu0 %v681
    %953 = vmatpush1.bf16.msra.mxu0 %v680
    %954 = vmatprep.subr.bf16.mxu0 %v689
    %955 = vmatpush1.bf16.msra.mxu0 %v688
    %956 = vmatprep.subr.bf16.mxu0 %v697
    %957 = vmatpush1.bf16.msra.mxu0 %v696
    %958 = vmatprep.subr.bf16.mxu0 %v705
    %959 = vmatpush1.bf16.msra.mxu0 %v704
    %960 = vmatprep.subr.bf16.mxu0 %v713
    %961 = vmatpush1.bf16.msra.mxu0 %v712
    %962 = vmatprep.mubr.bf16.mxu0 %v201
    %963 = vmatmul.mubr.bf16.gmra.mrb[0].mxu0 %v200
    %v964 = vpop.f32.mrb[0].mxu0
    %v965 = vadd.f32 0.0, %v964
    %v966 = vpop.f32.mrb[0].mxu0
    %v967 = vadd.f32 0.0, %v966
    %v968 = vpop.f32.mrb[0].mxu0
    %v969 = vadd.f32 0.0, %v968
    %v970 = vpop.f32.mrb[0].mxu0
    %v971 = vadd.f32 0.0, %v970
    %972 = vdwg.mxu0
    %973 = vmatprep.subr.bf16.mxu0 %v595
    %974 = vmatpush1.bf16.msra.mxu0 %v594
    %975 = vmatprep.subr.bf16.mxu0 %v603
    %976 = vmatpush1.bf16.msra.mxu0 %v602
    %977 = vmatprep.subr.bf16.mxu0 %v611
    %978 = vmatpush1.bf16.msra.mxu0 %v610
    %979 = vmatprep.subr.bf16.mxu0 %v619
    %980 = vmatpush1.bf16.msra.mxu0 %v618
    %981 = vmatprep.subr.bf16.mxu0 %v627
    %982 = vmatpush1.bf16.msra.mxu0 %v626
    %983 = vmatprep.subr.bf16.mxu0 %v635
    %984 = vmatpush1.bf16.msra.mxu0 %v634
    %985 = vmatprep.subr.bf16.mxu0 %v643
    %986 = vmatpush1.bf16.msra.mxu0 %v642
    %987 = vmatprep.subr.bf16.mxu0 %v651
    %988 = vmatpush1.bf16.msra.mxu0 %v650
    %989 = vmatprep.subr.bf16.mxu0 %v659
    %990 = vmatpush1.bf16.msra.mxu0 %v658
    %991 = vmatprep.subr.bf16.mxu0 %v667
    %992 = vmatpush1.bf16.msra.mxu0 %v666
    %993 = vmatprep.subr.bf16.mxu0 %v675
    %994 = vmatpush1.bf16.msra.mxu0 %v674
    %995 = vmatprep.subr.bf16.mxu0 %v683
    %996 = vmatpush1.bf16.msra.mxu0 %v682
    %997 = vmatprep.subr.bf16.mxu0 %v691
    %998 = vmatpush1.bf16.msra.mxu0 %v690
    %999 = vmatprep.subr.bf16.mxu0 %v699
    %1000 = vmatpush1.bf16.msra.mxu0 %v698
    %1001 = vmatprep.subr.bf16.mxu0 %v707
    %1002 = vmatpush1.bf16.msra.mxu0 %v706
    %1003 = vmatprep.subr.bf16.mxu0 %v715
    %1004 = vmatpush1.bf16.msra.mxu0 %v714
    %1005 = vmatprep.mubr.bf16.mxu0 %v201
    %1006 = vmatmul.mubr.bf16.gmra.mrb[0].mxu0 %v200
    %v1007 = vpop.f32.mrb[0].mxu0
    %v1008 = vadd.f32 0.0, %v1007
    %v1009 = vpop.f32.mrb[0].mxu0
    %v1010 = vadd.f32 0.0, %v1009
    %v1011 = vpop.f32.mrb[0].mxu0
    %v1012 = vadd.f32 0.0, %v1011
    %v1013 = vpop.f32.mrb[0].mxu0
    %v1014 = vadd.f32 0.0, %v1013
    %1015 = vdwg.mxu0
    %v1016 = vxor.u32 %v879, 2147483648
    %v1017 = vxor.u32 %v881, 2147483648
    %v1018 = vxor.u32 %v922, 2147483648
    %v1019 = vxor.u32 %v924, 2147483648
    %v1020 = vxor.u32 %v883, 2147483648
    %v1021 = vxor.u32 %v885, 2147483648
    %v1022 = vxor.u32 %v926, 2147483648
    %v1023 = vxor.u32 %v928, 2147483648
    %v1024 = vmul.f32 %v1016, 1.442695
    %v1025 = vpow.pop %v1024
    %v1026 = vmul.f32 %v1017, 1.442695
    %v1027 = vpow.pop %v1026
    %v1028 = vmul.f32 %v1018, 1.442695
    %v1029 = vpow.pop %v1028
    %v1030 = vmul.f32 %v1019, 1.442695
    %v1031 = vpow.pop %v1030
    %v1032 = vmul.f32 %v1020, 1.442695
    %v1033 = vpow.pop %v1032
    %v1034 = vmul.f32 %v1021, 1.442695
    %v1035 = vpow.pop %v1034
    %v1036 = vmul.f32 %v1022, 1.442695
    %v1037 = vpow.pop %v1036
    %v1038 = vmul.f32 %v1023, 1.442695
    %v1039 = vpow.pop %v1038
    %v1040 = vadd.f32 %v1025, 1.0
    %v1041 = vadd.f32 %v1027, 1.0
    %v1042 = vadd.f32 %v1029, 1.0
    %v1043 = vadd.f32 %v1031, 1.0
    %v1044 = vadd.f32 %v1033, 1.0
    %v1045 = vadd.f32 %v1035, 1.0
    %v1046 = vadd.f32 %v1037, 1.0
    %v1047 = vadd.f32 %v1039, 1.0
    %v1048 = vrcp.pop %v1040
    %v1049 = vmul.f32 1.0, %v1048
    %v1050 = vrcp.pop %v1041
    %v1051 = vmul.f32 1.0, %v1050
    %v1052 = vrcp.pop %v1042
    %v1053 = vmul.f32 1.0, %v1052
    %v1054 = vrcp.pop %v1043
    %v1055 = vmul.f32 1.0, %v1054
    %v1056 = vrcp.pop %v1044
    %v1057 = vmul.f32 1.0, %v1056
    %v1058 = vrcp.pop %v1045
    %v1059 = vmul.f32 1.0, %v1058
    %v1060 = vrcp.pop %v1046
    %v1061 = vmul.f32 1.0, %v1060
    %v1062 = vrcp.pop %v1047
    %v1063 = vmul.f32 1.0, %v1062
    %v1064 = vmul.f32 %v879, %v1049
    %v1065 = vmul.f32 %v881, %v1051
    %v1066 = vmul.f32 %v922, %v1053
    %v1067 = vmul.f32 %v924, %v1055
    %v1068 = vmul.f32 %v883, %v1057
    %v1069 = vmul.f32 %v885, %v1059
    %v1070 = vmul.f32 %v926, %v1061
    %v1071 = vmul.f32 %v928, %v1063
    %v1072 = vmul.f32 %v1064, %v965
    %v1073 = vmul.f32 %v1065, %v967
    %v1074 = vmul.f32 %v1066, %v1008
    %v1075 = vmul.f32 %v1067, %v1010
    %v1076 = vmul.f32 %v1068, %v969
    %v1077 = vmul.f32 %v1069, %v971
    %v1078 = vmul.f32 %v1070, %v1012
    %v1079 = vmul.f32 %v1071, %v1014
    %v1080 = vld [vmem:[#allocation2] sm:$0xff]
    %v1081 = vld [vmem:[#allocation2 + $0x8] sm:$0xff]
    %v1082 = vld [vmem:[#allocation2 + $0x10] sm:$0xff]
    %v1083 = vld [vmem:[#allocation2 + $0x18] sm:$0xff]
    %v1084 = vpack.c.bf16 %v1076, %v1072
    %v1085 = vpack.c.bf16 %v1077, %v1073
    %v1086 = vpack.c.bf16 %v1078, %v1074
    %v1087 = vpack.c.bf16 %v1079, %v1075
    %v1088 = vld [vmem:[#allocation8] sm:$0xff]
    %v1089 = vld [vmem:[#allocation8 + $0x8] sm:$0xff]
    %v1090 = vld [vmem:[#allocation8 + $0x10] sm:$0xff]
    %v1091 = vld [vmem:[#allocation8 + $0x18] sm:$0xff]
    %v1092 = vld [vmem:[#allocation8 + $0x20] sm:$0xff]
    %v1093 = vld [vmem:[#allocation8 + $0x28] sm:$0xff]
    %v1094 = vld [vmem:[#allocation8 + $0x30] sm:$0xff]
    %v1095 = vld [vmem:[#allocation8 + $0x38] sm:$0xff]
    %v1096 = vld [vmem:[#allocation8 + $0x40] sm:$0xff]
    %v1097 = vld [vmem:[#allocation8 + $0x48] sm:$0xff]
    %v1098 = vld [vmem:[#allocation8 + $0x50] sm:$0xff]
    %v1099 = vld [vmem:[#allocation8 + $0x58] sm:$0xff]
    %v1100 = vld [vmem:[#allocation8 + $0x60] sm:$0xff]
    %v1101 = vld [vmem:[#allocation8 + $0x68] sm:$0xff]
    %v1102 = vld [vmem:[#allocation8 + $0x70] sm:$0xff]
    %v1103 = vld [vmem:[#allocation8 + $0x78] sm:$0xff]
    %v1104 = vld [vmem:[#allocation8 + $0x80] sm:$0xff]
    %v1105 = vld [vmem:[#allocation8 + $0x88] sm:$0xff]
    %v1106 = vld [vmem:[#allocation8 + $0x90] sm:$0xff]
    %v1107 = vld [vmem:[#allocation8 + $0x98] sm:$0xff]
    %v1108 = vld [vmem:[#allocation8 + $0xa0] sm:$0xff]
    %v1109 = vld [vmem:[#allocation8 + $0xa8] sm:$0xff]
    %v1110 = vld [vmem:[#allocation8 + $0xb0] sm:$0xff]
    %v1111 = vld [vmem:[#allocation8 + $0xb8] sm:$0xff]
    %v1112 = vld [vmem:[#allocation8 + $0xc0] sm:$0xff]
    %v1113 = vld [vmem:[#allocation8 + $0xc8] sm:$0xff]
    %v1114 = vld [vmem:[#allocation8 + $0xd0] sm:$0xff]
    %v1115 = vld [vmem:[#allocation8 + $0xd8] sm:$0xff]
    %v1116 = vld [vmem:[#allocation8 + $0xe0] sm:$0xff]
    %v1117 = vld [vmem:[#allocation8 + $0xe8] sm:$0xff]
    %v1118 = vld [vmem:[#allocation8 + $0xf0] sm:$0xff]
    %v1119 = vld [vmem:[#allocation8 + $0xf8] sm:$0xff]
    %v1120 = vld [vmem:[#allocation8 + $0x100] sm:$0xff]
    %v1121 = vld [vmem:[#allocation8 + $0x108] sm:$0xff]
    %v1122 = vld [vmem:[#allocation8 + $0x110] sm:$0xff]
    %v1123 = vld [vmem:[#allocation8 + $0x118] sm:$0xff]
    %v1124 = vld [vmem:[#allocation8 + $0x120] sm:$0xff]
    %v1125 = vld [vmem:[#allocation8 + $0x128] sm:$0xff]
    %v1126 = vld [vmem:[#allocation8 + $0x130] sm:$0xff]
    %v1127 = vld [vmem:[#allocation8 + $0x138] sm:$0xff]
    %v1128 = vld [vmem:[#allocation8 + $0x140] sm:$0xff]
    %v1129 = vld [vmem:[#allocation8 + $0x148] sm:$0xff]
    %v1130 = vld [vmem:[#allocation8 + $0x150] sm:$0xff]
    %v1131 = vld [vmem:[#allocation8 + $0x158] sm:$0xff]
    %v1132 = vld [vmem:[#allocation8 + $0x160] sm:$0xff]
    %v1133 = vld [vmem:[#allocation8 + $0x168] sm:$0xff]
    %v1134 = vld [vmem:[#allocation8 + $0x170] sm:$0xff]
    %v1135 = vld [vmem:[#allocation8 + $0x178] sm:$0xff]
    %v1136 = vld [vmem:[#allocation8 + $0x180] sm:$0xff]
    %v1137 = vld [vmem:[#allocation8 + $0x188] sm:$0xff]
    %v1138 = vld [vmem:[#allocation8 + $0x190] sm:$0xff]
    %v1139 = vld [vmem:[#allocation8 + $0x198] sm:$0xff]
    %v1140 = vld [vmem:[#allocation8 + $0x1a0] sm:$0xff]
    %v1141 = vld [vmem:[#allocation8 + $0x1a8] sm:$0xff]
    %v1142 = vld [vmem:[#allocation8 + $0x1b0] sm:$0xff]
    %v1143 = vld [vmem:[#allocation8 + $0x1b8] sm:$0xff]
    %v1144 = vld [vmem:[#allocation8 + $0x1c0] sm:$0xff]
    %v1145 = vld [vmem:[#allocation8 + $0x1c8] sm:$0xff]
    %v1146 = vld [vmem:[#allocation8 + $0x1d0] sm:$0xff]
    %v1147 = vld [vmem:[#allocation8 + $0x1d8] sm:$0xff]
    %v1148 = vld [vmem:[#allocation8 + $0x1e0] sm:$0xff]
    %v1149 = vld [vmem:[#allocation8 + $0x1e8] sm:$0xff]
    %v1150 = vld [vmem:[#allocation8 + $0x1f0] sm:$0xff]
    %v1151 = vld [vmem:[#allocation8 + $0x1f8] sm:$0xff]
    %v1216 = vunpack.c.l.b16 %v1088
    %v1217 = vunpack.c.h.b16 %v1088
    %v1218 = vunpack.c.l.b16 %v1089
    %v1219 = vunpack.c.h.b16 %v1089
    %v1220 = vunpack.c.l.b16 %v1090
    %v1221 = vunpack.c.h.b16 %v1090
    %v1222 = vunpack.c.l.b16 %v1091
    %v1223 = vunpack.c.h.b16 %v1091
    %v1224 = vunpack.c.l.b16 %v1092
    %v1225 = vunpack.c.h.b16 %v1092
    %v1226 = vunpack.c.l.b16 %v1093
    %v1227 = vunpack.c.h.b16 %v1093
    %v1228 = vunpack.c.l.b16 %v1094
    %v1229 = vunpack.c.h.b16 %v1094
    %v1230 = vunpack.c.l.b16 %v1095
    %v1231 = vunpack.c.h.b16 %v1095
    %v1232 = vunpack.c.l.b16 %v1096
    %v1233 = vunpack.c.h.b16 %v1096
    %v1234 = vunpack.c.l.b16 %v1097
    %v1235 = vunpack.c.h.b16 %v1097
    %v1236 = vunpack.c.l.b16 %v1098
    %v1237 = vunpack.c.h.b16 %v1098
    %v1238 = vunpack.c.l.b16 %v1099
    %v1239 = vunpack.c.h.b16 %v1099
    %v1240 = vunpack.c.l.b16 %v1100
    %v1241 = vunpack.c.h.b16 %v1100
    %v1242 = vunpack.c.l.b16 %v1101
    %v1243 = vunpack.c.h.b16 %v1101
    %v1244 = vunpack.c.l.b16 %v1102
    %v1245 = vunpack.c.h.b16 %v1102
    %v1246 = vunpack.c.l.b16 %v1103
    %v1247 = vunpack.c.h.b16 %v1103
    %v1248 = vunpack.c.l.b16 %v1104
    %v1249 = vunpack.c.h.b16 %v1104
    %v1250 = vunpack.c.l.b16 %v1105
    %v1251 = vunpack.c.h.b16 %v1105
    %v1252 = vunpack.c.l.b16 %v1106
    %v1253 = vunpack.c.h.b16 %v1106
    %v1254 = vunpack.c.l.b16 %v1107
    %v1255 = vunpack.c.h.b16 %v1107
    %v1256 = vunpack.c.l.b16 %v1108
    %v1257 = vunpack.c.h.b16 %v1108
    %v1258 = vunpack.c.l.b16 %v1109
    %v1259 = vunpack.c.h.b16 %v1109
    %v1260 = vunpack.c.l.b16 %v1110
    %v1261 = vunpack.c.h.b16 %v1110
    %v1262 = vunpack.c.l.b16 %v1111
    %v1263 = vunpack.c.h.b16 %v1111
    %v1264 = vunpack.c.l.b16 %v1112
    %v1265 = vunpack.c.h.b16 %v1112
    %v1266 = vunpack.c.l.b16 %v1113
    %v1267 = vunpack.c.h.b16 %v1113
    %v1268 = vunpack.c.l.b16 %v1114
    %v1269 = vunpack.c.h.b16 %v1114
    %v1270 = vunpack.c.l.b16 %v1115
    %v1271 = vunpack.c.h.b16 %v1115
    %v1272 = vunpack.c.l.b16 %v1116
    %v1273 = vunpack.c.h.b16 %v1116
    %v1274 = vunpack.c.l.b16 %v1117
    %v1275 = vunpack.c.h.b16 %v1117
    %v1276 = vunpack.c.l.b16 %v1118
    %v1277 = vunpack.c.h.b16 %v1118
    %v1278 = vunpack.c.l.b16 %v1119
    %v1279 = vunpack.c.h.b16 %v1119
    %v1280 = vunpack.c.l.b16 %v1120
    %v1281 = vunpack.c.h.b16 %v1120
    %v1282 = vunpack.c.l.b16 %v1121
    %v1283 = vunpack.c.h.b16 %v1121
    %v1284 = vunpack.c.l.b16 %v1122
    %v1285 = vunpack.c.h.b16 %v1122
    %v1286 = vunpack.c.l.b16 %v1123
    %v1287 = vunpack.c.h.b16 %v1123
    %v1288 = vunpack.c.l.b16 %v1124
    %v1289 = vunpack.c.h.b16 %v1124
    %v1290 = vunpack.c.l.b16 %v1125
    %v1291 = vunpack.c.h.b16 %v1125
    %v1292 = vunpack.c.l.b16 %v1126
    %v1293 = vunpack.c.h.b16 %v1126
    %v1294 = vunpack.c.l.b16 %v1127
    %v1295 = vunpack.c.h.b16 %v1127
    %v1296 = vunpack.c.l.b16 %v1128
    %v1297 = vunpack.c.h.b16 %v1128
    %v1298 = vunpack.c.l.b16 %v1129
    %v1299 = vunpack.c.h.b16 %v1129
    %v1300 = vunpack.c.l.b16 %v1130
    %v1301 = vunpack.c.h.b16 %v1130
    %v1302 = vunpack.c.l.b16 %v1131
    %v1303 = vunpack.c.h.b16 %v1131
    %v1304 = vunpack.c.l.b16 %v1132
    %v1305 = vunpack.c.h.b16 %v1132
    %v1306 = vunpack.c.l.b16 %v1133
    %v1307 = vunpack.c.h.b16 %v1133
    %v1308 = vunpack.c.l.b16 %v1134
    %v1309 = vunpack.c.h.b16 %v1134
    %v1310 = vunpack.c.l.b16 %v1135
    %v1311 = vunpack.c.h.b16 %v1135
    %v1312 = vunpack.c.l.b16 %v1136
    %v1313 = vunpack.c.h.b16 %v1136
    %v1314 = vunpack.c.l.b16 %v1137
    %v1315 = vunpack.c.h.b16 %v1137
    %v1316 = vunpack.c.l.b16 %v1138
    %v1317 = vunpack.c.h.b16 %v1138
    %v1318 = vunpack.c.l.b16 %v1139
    %v1319 = vunpack.c.h.b16 %v1139
    %v1320 = vunpack.c.l.b16 %v1140
    %v1321 = vunpack.c.h.b16 %v1140
    %v1322 = vunpack.c.l.b16 %v1141
    %v1323 = vunpack.c.h.b16 %v1141
    %v1324 = vunpack.c.l.b16 %v1142
    %v1325 = vunpack.c.h.b16 %v1142
    %v1326 = vunpack.c.l.b16 %v1143
    %v1327 = vunpack.c.h.b16 %v1143
    %v1328 = vunpack.c.l.b16 %v1144
    %v1329 = vunpack.c.h.b16 %v1144
    %v1330 = vunpack.c.l.b16 %v1145
    %v1331 = vunpack.c.h.b16 %v1145
    %v1332 = vunpack.c.l.b16 %v1146
    %v1333 = vunpack.c.h.b16 %v1146
    %v1334 = vunpack.c.l.b16 %v1147
    %v1335 = vunpack.c.h.b16 %v1147
    %v1336 = vunpack.c.l.b16 %v1148
    %v1337 = vunpack.c.h.b16 %v1148
    %v1338 = vunpack.c.l.b16 %v1149
    %v1339 = vunpack.c.h.b16 %v1149
    %v1340 = vunpack.c.l.b16 %v1150
    %v1341 = vunpack.c.h.b16 %v1150
    %v1342 = vunpack.c.l.b16 %v1151
    %v1343 = vunpack.c.h.b16 %v1151
    %v1344 = vpack.c.b16 %v1218, %v1216
    %v1345 = vpack.c.b16 %v1219, %v1217
    %v1346 = vpack.c.b16 %v1222, %v1220
    %v1347 = vpack.c.b16 %v1223, %v1221
    %v1348 = vpack.c.b16 %v1226, %v1224
    %v1349 = vpack.c.b16 %v1227, %v1225
    %v1350 = vpack.c.b16 %v1230, %v1228
    %v1351 = vpack.c.b16 %v1231, %v1229
    %v1352 = vpack.c.b16 %v1234, %v1232
    %v1353 = vpack.c.b16 %v1235, %v1233
    %v1354 = vpack.c.b16 %v1238, %v1236
    %v1355 = vpack.c.b16 %v1239, %v1237
    %v1356 = vpack.c.b16 %v1242, %v1240
    %v1357 = vpack.c.b16 %v1243, %v1241
    %v1358 = vpack.c.b16 %v1246, %v1244
    %v1359 = vpack.c.b16 %v1247, %v1245
    %v1360 = vpack.c.b16 %v1250, %v1248
    %v1361 = vpack.c.b16 %v1251, %v1249
    %v1362 = vpack.c.b16 %v1254, %v1252
    %v1363 = vpack.c.b16 %v1255, %v1253
    %v1364 = vpack.c.b16 %v1258, %v1256
    %v1365 = vpack.c.b16 %v1259, %v1257
    %v1366 = vpack.c.b16 %v1262, %v1260
    %v1367 = vpack.c.b16 %v1263, %v1261
    %v1368 = vpack.c.b16 %v1266, %v1264
    %v1369 = vpack.c.b16 %v1267, %v1265
    %v1370 = vpack.c.b16 %v1270, %v1268
    %v1371 = vpack.c.b16 %v1271, %v1269
    %v1372 = vpack.c.b16 %v1274, %v1272
    %v1373 = vpack.c.b16 %v1275, %v1273
    %v1374 = vpack.c.b16 %v1278, %v1276
    %v1375 = vpack.c.b16 %v1279, %v1277
    %v1376 = vpack.c.b16 %v1282, %v1280
    %v1377 = vpack.c.b16 %v1283, %v1281
    %v1378 = vpack.c.b16 %v1286, %v1284
    %v1379 = vpack.c.b16 %v1287, %v1285
    %v1380 = vpack.c.b16 %v1290, %v1288
    %v1381 = vpack.c.b16 %v1291, %v1289
    %v1382 = vpack.c.b16 %v1294, %v1292
    %v1383 = vpack.c.b16 %v1295, %v1293
    %v1384 = vpack.c.b16 %v1298, %v1296
    %v1385 = vpack.c.b16 %v1299, %v1297
    %v1386 = vpack.c.b16 %v1302, %v1300
    %v1387 = vpack.c.b16 %v1303, %v1301
    %v1388 = vpack.c.b16 %v1306, %v1304
    %v1389 = vpack.c.b16 %v1307, %v1305
    %v1390 = vpack.c.b16 %v1310, %v1308
    %v1391 = vpack.c.b16 %v1311, %v1309
    %v1392 = vpack.c.b16 %v1314, %v1312
    %v1393 = vpack.c.b16 %v1315, %v1313
    %v1394 = vpack.c.b16 %v1318, %v1316
    %v1395 = vpack.c.b16 %v1319, %v1317
    %v1396 = vpack.c.b16 %v1322, %v1320
    %v1397 = vpack.c.b16 %v1323, %v1321
    %v1398 = vpack.c.b16 %v1326, %v1324
    %v1399 = vpack.c.b16 %v1327, %v1325
    %v1400 = vpack.c.b16 %v1330, %v1328
    %v1401 = vpack.c.b16 %v1331, %v1329
    %v1402 = vpack.c.b16 %v1334, %v1332
    %v1403 = vpack.c.b16 %v1335, %v1333
    %v1404 = vpack.c.b16 %v1338, %v1336
    %v1405 = vpack.c.b16 %v1339, %v1337
    %v1406 = vpack.c.b16 %v1342, %v1340
    %v1407 = vpack.c.b16 %v1343, %v1341
    %1472 = vmatprep.subr.bf16.mxu0 %v1345
    %1473 = vmatpush1.bf16.msra.mxu0 %v1344
    %1474 = vmatprep.subr.bf16.mxu0 %v1347
    %1475 = vmatpush1.bf16.msra.mxu0 %v1346
    %1476 = vmatprep.subr.bf16.mxu0 %v1349
    %1477 = vmatpush1.bf16.msra.mxu0 %v1348
    %1478 = vmatprep.subr.bf16.mxu0 %v1351
    %1479 = vmatpush1.bf16.msra.mxu0 %v1350
    %1480 = vmatprep.subr.bf16.mxu0 %v1353
    %1481 = vmatpush1.bf16.msra.mxu0 %v1352
    %1482 = vmatprep.subr.bf16.mxu0 %v1355
    %1483 = vmatpush1.bf16.msra.mxu0 %v1354
    %1484 = vmatprep.subr.bf16.mxu0 %v1357
    %1485 = vmatpush1.bf16.msra.mxu0 %v1356
    %1486 = vmatprep.subr.bf16.mxu0 %v1359
    %1487 = vmatpush1.bf16.msra.mxu0 %v1358
    %1488 = vmatprep.subr.bf16.mxu0 %v1361
    %1489 = vmatpush1.bf16.msra.mxu0 %v1360
    %1490 = vmatprep.subr.bf16.mxu0 %v1363
    %1491 = vmatpush1.bf16.msra.mxu0 %v1362
    %1492 = vmatprep.subr.bf16.mxu0 %v1365
    %1493 = vmatpush1.bf16.msra.mxu0 %v1364
    %1494 = vmatprep.subr.bf16.mxu0 %v1367
    %1495 = vmatpush1.bf16.msra.mxu0 %v1366
    %1496 = vmatprep.subr.bf16.mxu0 %v1369
    %1497 = vmatpush1.bf16.msra.mxu0 %v1368
    %1498 = vmatprep.subr.bf16.mxu0 %v1371
    %1499 = vmatpush1.bf16.msra.mxu0 %v1370
    %1500 = vmatprep.subr.bf16.mxu0 %v1373
    %1501 = vmatpush1.bf16.msra.mxu0 %v1372
    %1502 = vmatprep.subr.bf16.mxu0 %v1375
    %1503 = vmatpush1.bf16.msra.mxu0 %v1374
    %1504 = vmatprep.mubr.bf16.mxu0 %v1085
    %1505 = vmatmul.mubr.bf16.gmra.mrb[0].mxu0 %v1084
    %v1506 = vpop.f32.mrb[0].mxu0
    %v1507 = vadd.f32 0.0, %v1506
    %v1508 = vpop.f32.mrb[0].mxu0
    %v1509 = vadd.f32 0.0, %v1508
    %v1510 = vpop.f32.mrb[0].mxu0
    %v1511 = vadd.f32 0.0, %v1510
    %v1512 = vpop.f32.mrb[0].mxu0
    %v1513 = vadd.f32 0.0, %v1512
    %1514 = vdwg.mxu0
    %1515 = vmatprep.subr.bf16.mxu0 %v1377
    %1516 = vmatpush1.bf16.msra.mxu0 %v1376
    %1517 = vmatprep.subr.bf16.mxu0 %v1379
    %1518 = vmatpush1.bf16.msra.mxu0 %v1378
    %1519 = vmatprep.subr.bf16.mxu0 %v1381
    %1520 = vmatpush1.bf16.msra.mxu0 %v1380
    %1521 = vmatprep.subr.bf16.mxu0 %v1383
    %1522 = vmatpush1.bf16.msra.mxu0 %v1382
    %1523 = vmatprep.subr.bf16.mxu0 %v1385
    %1524 = vmatpush1.bf16.msra.mxu0 %v1384
    %1525 = vmatprep.subr.bf16.mxu0 %v1387
    %1526 = vmatpush1.bf16.msra.mxu0 %v1386
    %1527 = vmatprep.subr.bf16.mxu0 %v1389
    %1528 = vmatpush1.bf16.msra.mxu0 %v1388
    %1529 = vmatprep.subr.bf16.mxu0 %v1391
    %1530 = vmatpush1.bf16.msra.mxu0 %v1390
    %1531 = vmatprep.subr.bf16.mxu0 %v1393
    %1532 = vmatpush1.bf16.msra.mxu0 %v1392
    %1533 = vmatprep.subr.bf16.mxu0 %v1395
    %1534 = vmatpush1.bf16.msra.mxu0 %v1394
    %1535 = vmatprep.subr.bf16.mxu0 %v1397
    %1536 = vmatpush1.bf16.msra.mxu0 %v1396
    %1537 = vmatprep.subr.bf16.mxu0 %v1399
    %1538 = vmatpush1.bf16.msra.mxu0 %v1398
    %1539 = vmatprep.subr.bf16.mxu0 %v1401
    %1540 = vmatpush1.bf16.msra.mxu0 %v1400
    %1541 = vmatprep.subr.bf16.mxu0 %v1403
    %1542 = vmatpush1.bf16.msra.mxu0 %v1402
    %1543 = vmatprep.subr.bf16.mxu0 %v1405
    %1544 = vmatpush1.bf16.msra.mxu0 %v1404
    %1545 = vmatprep.subr.bf16.mxu0 %v1407
    %1546 = vmatpush1.bf16.msra.mxu0 %v1406
    %1547 = vmatprep.mubr.bf16.mxu0 %v1087
    %1548 = vmatmul.mubr.bf16.gmra.mrb[0].mxu0 %v1086
    %v1549 = vpop.f32.mrb[0].mxu0
    %v1550 = vadd.f32 %v1507, %v1549
    %v1551 = vpop.f32.mrb[0].mxu0
    %v1552 = vadd.f32 %v1509, %v1551
    %v1553 = vpop.f32.mrb[0].mxu0
    %v1554 = vadd.f32 %v1511, %v1553
    %v1555 = vpop.f32.mrb[0].mxu0
    %v1556 = vadd.f32 %v1513, %v1555
    %1557 = vdwg.mxu0
    %v1558 = vadd.f32 %v1080, %v1550
    %v1559 = vadd.f32 %v1081, %v1552
    %v1560 = vadd.f32 %v1082, %v1554
    %v1561 = vadd.f32 %v1083, %v1556
    %1562 = vst [vmem:[#allocation2] sm:$0xff] %v1558
    %1563 = vst [vmem:[#allocation2 + $0x8] sm:$0xff] %v1559
    %1564 = vst [vmem:[#allocation2 + $0x10] sm:$0xff] %v1560
    %1565 = vst [vmem:[#allocation2 + $0x18] sm:$0xff] %v1561
    // Predicated region
    $region30: #{tpu_custom_call.1} parent=1 // pred_check
      %p1566 = pneg %p56
    $region31: #{tpu_custom_call.1} parent=1 // pred_check_branch
      %1568 = sbr.rel (%p1566) target = $region33
    $region32: #{tpu_custom_call.1} parent=1 // pred_region
      %v1569 = vld [vmem:[#allocation2] sm:$0xff]
      %v1570 = vld [vmem:[#allocation2 + $0x8] sm:$0xff]
      %v1571 = vld [vmem:[#allocation2 + $0x10] sm:$0xff]
      %v1572 = vld [vmem:[#allocation2 + $0x18] sm:$0xff]
      %1573 = vst [vmem:[#allocation9] sm:$0xff] %v1569
      %1574 = vst [vmem:[#allocation9 + $0x8] sm:$0xff] %v1570
      %1575 = vst [vmem:[#allocation9 + $0x10] sm:$0xff] %v1571
      %1576 = vst [vmem:[#allocation9 + $0x18] sm:$0xff] %v1572
    $region33: #{tpu_custom_call.1} parent=1 // pred_fallthru
      _
    // Predicated region
    $region34: #{tpu_custom_call.1} parent=1 // pred_check
      _
    $region35: #{tpu_custom_call.1} parent=1 // pred_check_branch
      %1578 = sbr.rel (0) target = $region37
    $region36: #{tpu_custom_call.1} parent=1 // pred_region
      %s1580 = ssub.s32 512, 512
      %1581 = vsyncadd [#allocation5], %s1580
      %s1582 = sshll.u32 [#allocation9], 4
      %s1583 = int_to_ptr.vmem [resolvable:$true] %s1582
      %1588 = dma.vmem_to_hbm [thread:$0]  %s1583, 512, %s3, [#allocation5], 256, 256, 16
    $region37: #{tpu_custom_call.1} parent=1 // pred_fallthru
      _
    // Predicated region
    $region38: #{tpu_custom_call.1} parent=1 // pred_check
      _
    $region39: #{tpu_custom_call.1} parent=1 // pred_check_branch
      %1590 = sbr.rel (0) target = $region41
    $region40: #{tpu_custom_call.1} parent=1 // pred_region
      %1591 = dma.done [#allocation5], 512
    $region41: #{tpu_custom_call.1} parent=1 // pred_fallthru
      _
    %1592 = vsyncpa [#allocation4], 1
    %1593 = vsyncpa [#allocation7], 1
    %1594 = vsyncpa [#allocation5], 1

</llo_original>
